<compile_context>
chip_gen: v7x
topology: tpu7x:2x2x1
jax: 0.10.0
libtpu: 0.0.40
codegen_flags: <defaults>
</compile_context>

<pallas_src>
import jax
import jax.numpy as jnp
from jax.experimental import pallas as pl
from jax.experimental.pallas import tpu as pltpu


def graphconv_kernel(feat_ref, a_ref, w1_ref, w2_ref, bias_ref, out_ref):
    # feat_ref : (Bt*N, D)  caller dtype (f32) -- flattened rows
    # a_ref    : (Bt, N, N) caller dtype (row-normalized adjacency)
    # w1_ref   : (D, F)     compute dtype (bf16)
    # w2_ref   : (D, F)     compute dtype (bf16)
    # bias_ref : (1, F)     f32
    # out_ref  : (Bt, N, F) f32
    bt, n, _ = a_ref.shape
    f = out_ref.shape[-1]
    cdt = w2_ref.dtype

    # Cast to the MXU compute dtype in VMEM (no extra HBM pass in the wrapper).
    feat = feat_ref[...].astype(cdt)

    # P2 = feat @ W2, consumed immediately by the aggregation matmul so the full
    # wide product is never held live.
    p2 = jnp.dot(feat, w2_ref[...], preferred_element_type=jnp.float32)
    p2 = p2.reshape(bt, n, f).astype(cdt)
    ap2 = jnp.einsum('bij,bjf->bif', a_ref[...].astype(cdt), p2,
                     preferred_element_type=jnp.float32)      # == (A @ feat) @ W2

    p1 = jnp.dot(feat, w1_ref[...], preferred_element_type=jnp.float32)

    out = p1.reshape(bt, n, f) + ap2 + bias_ref[...]           # bias broadcasts
    out_ref[...] = jnp.maximum(out, 0.0).astype(out_ref.dtype)


def _num_tensorcores():
    """Best-effort TensorCore count of the local device (v5e/v6e: 1, v4/v5p/v7x: 2)."""
    try:
        dev = jax.devices()[0]
        nc = getattr(dev, "num_cores", None)
        if nc:
            return int(nc)
        kind = str(getattr(dev, "device_kind", "")).lower()
        if any(t in kind for t in ("v4", "v5p", "v7")):
            return 2
        return 1
    except Exception:
        return 1


def _vmem_capacity_bytes():
    try:
        return int(pltpu.get_tpu_info().vmem_capacity_bytes)
    except Exception:
        return 64 * 1024 * 1024   # conservative fallback (v7x per-TC capacity)


def _per_step_io_bytes(bt, N, D, F):
    # Double-buffered f32 feature / adjacency / output blocks (weights and bias
    # are tiny and constant-indexed).
    return 2 * 4 * bt * N * (N + D + F)


def _pick_batch_tile(B, N, D, F, num_cores, vmem_budget_bytes):
    """Largest divisor of B that (a) yields >= num_cores grid steps (1 on
    single-TC v5e/v6e, one per core on dual-TC chips), (b) keeps the flattened
    feature block sublane-aligned, and (c) fits the VMEM budget."""
    divisors = [d for d in range(B, 0, -1) if B % d == 0]
    want_steps = min(max(num_cores, 1), B)
    for bt in divisors:
        steps = B // bt
        if steps < want_steps:
            continue
        if steps > 1 and (bt * N) % 8 != 0:
            continue
        if _per_step_io_bytes(bt, N, D, F) <= vmem_budget_bytes:
            return bt
    # Relax the step-count preference if VMEM is the binder.
    for bt in divisors:
        if (B // bt == 1 or (bt * N) % 8 == 0) and \
                _per_step_io_bytes(bt, N, D, F) <= vmem_budget_bytes:
            return bt
    # Nothing fits the budget (large-N regime; see TODO at the top of the file):
    # smallest sublane-legal tile.
    for bt in reversed(divisors):
        if B // bt == 1 or (bt * N) % 8 == 0:
            return bt
    return B


def graph_conv(features, A, weight, bias, *, batch_tile=None,
               compute_dtype=jnp.bfloat16):
    """features: (B, N, D), A: (B, N, N) row-normalized, weight: (2D, F), bias: (F,)."""
    B, N, D = features.shape
    F = weight.shape[1]
    assert weight.shape[0] == 2 * D
    assert A.shape == (B, N, N)
    out_dtype = features.dtype

    num_cores = _num_tensorcores()
    vmem_cap = _vmem_capacity_bytes()
    vmem_budget = int(0.4 * vmem_cap)

    if batch_tile is None:
        batch_tile = _pick_batch_tile(B, N, D, F, num_cores, vmem_budget)
    assert B % batch_tile == 0, "batch_tile must divide the batch size"
    grid = (B // batch_tile,)
    rows = batch_tile * N

    # Split + cast the (tiny) weight; the big A / feature arrays stay in the
    # caller's dtype and are cast to bf16 in VMEM inside the kernel.
    w1 = weight[:D, :].astype(compute_dtype)
    w2 = weight[D:, :].astype(compute_dtype)
    bias2 = bias.reshape(1, F).astype(jnp.float32)

    # Free metadata reshape: present a clean (B*N, D) slab to the kernel.
    feat2 = features.reshape(B * N, D)

    # Raise the scoped-VMEM limit only when the per-step footprint exceeds the
    # smallest (v5e) default; cap safely below physical capacity.
    est = int(1.5 * _per_step_io_bytes(batch_tile, N, D, F)) + (1 << 20)
    vmem_limit = min(est, int(0.9 * vmem_cap)) if est > (16 << 20) else None

    return pl.pallas_call(
        graphconv_kernel,
        out_shape=jax.ShapeDtypeStruct((B, N, F), out_dtype),
        grid_spec=pltpu.PrefetchScalarGridSpec(
            num_scalar_prefetch=0,
            grid=grid,
            in_specs=[
                pl.BlockSpec((rows, D), lambda b: (b, 0)),              # features (flat)
                pl.BlockSpec((batch_tile, N, N), lambda b: (b, 0, 0)),  # A
                pl.BlockSpec((D, F), lambda b: (0, 0)),                 # W1
                pl.BlockSpec((D, F), lambda b: (0, 0)),                 # W2
                # NOTE: for large D/F these constant-indexed weight/bias specs
                # could be single-buffered (pipeline_mode=pl.Buffered(1)) to
                # reclaim VMEM under v7x's 64 MiB budget.
                pl.BlockSpec((1, F), lambda b: (0, 0)),                 # bias
            ],
            out_specs=pl.BlockSpec((batch_tile, N, F), lambda b: (b, 0, 0)),
        ),
        compiler_params=pltpu.CompilerParams(
            dimension_semantics=("parallel",),
            vmem_limit_bytes=vmem_limit),
    )(feat2, A, w1, w2, bias2)


if __name__ == "__main__":
    # Small shapes consistent with the module: nodes=16, in_dim=32, out_dim=32,
    # batch=8 (exercises multi-batch-per-step and the core-aware grid choice).
    B, N, D, F = 8, 16, 32, 32

    key = jax.random.PRNGKey(0)
    k_feat, k_a, k_w = jax.random.split(key, 3)

    features = jax.random.normal(k_feat, (B, N, D), dtype=jnp.float32)

    # Row-normalized adjacency (what MeanAggregator expects to have been given).
    a_raw = jax.random.uniform(k_a, (B, N, N), dtype=jnp.float32)
    A = a_raw / jnp.sum(a_raw, axis=-1, keepdims=True)

    # Deterministic xavier_uniform_ for weight (2D, F); bias = 0.
    fan_in, fan_out = 2 * D, F
    bound = (6.0 / (fan_in + fan_out)) ** 0.5
    weight = jax.random.uniform(k_w, (2 * D, F), dtype=jnp.float32,
                                minval=-bound, maxval=bound)
    bias = jnp.zeros((F,), dtype=jnp.float32)

    out = graph_conv(features, A, weight, bias)
    out = jax.block_until_ready(out)

    # Pure-JAX f32 reference of the exact PyTorch semantics.
    agg_ref = jnp.einsum('bij,bjd->bid', A, features)
    cat_ref = jnp.concatenate([features, agg_ref], axis=2)
    ref = jax.nn.relu(jnp.einsum('bnd,df->bnf', cat_ref, weight) + bias)

    assert out.shape == (B, N, F)
    max_err = float(jnp.max(jnp.abs(out - ref)))
    # bf16 MXU operands -> looser tolerance than a pure-f32 variant.
    assert jnp.allclose(out, ref, atol=5e-2, rtol=5e-2), f"max_err={max_err}"

    print("KERNEL_OK")
</pallas_src>

<mosaic_0001>
module attributes {stable_mosaic.version = 11 : i64} {
  func.func @graphconv_kernel(%arg0: i32, %arg1: memref<128x32xf32, #tpu.memory_space<vmem>>, %arg2: memref<8x16x16xf32, #tpu.memory_space<vmem>>, %arg3: memref<32x32xbf16, #tpu.memory_space<vmem>>, %arg4: memref<32x32xbf16, #tpu.memory_space<vmem>>, %arg5: memref<1x32xf32, #tpu.memory_space<vmem>>, %arg6: memref<8x16x32xf32, #tpu.memory_space<vmem>>) attributes {dimension_semantics = [#tpu.dimension_semantics<parallel>], iteration_bounds = array<i64: 1>, scalar_prefetch = 0 : i64, scratch_operands = 0 : i64, tpu.core_type = #tpu.core_type<tc>, window_params = [{transform_indices = @transform_0, window_bounds = array<i64: 128, 32>}, {transform_indices = @transform_1, window_bounds = array<i64: 8, 16, 16>}, {pipeline_mode = #tpu.pipeline_mode<synchronous>, transform_indices = @transform_2, window_bounds = array<i64: 32, 32>}, {pipeline_mode = #tpu.pipeline_mode<synchronous>, transform_indices = @transform_3, window_bounds = array<i64: 32, 32>}, {pipeline_mode = #tpu.pipeline_mode<synchronous>, transform_indices = @transform_4, window_bounds = array<i64: 1, 32>}, {transform_indices = @transform_5, window_bounds = array<i64: 8, 16, 32>}]} {
    %c0 = arith.constant 0 : index
    %c0_0 = arith.constant 0 : index
    %0 = vector.load %arg1[%c0, %c0_0] : memref<128x32xf32, #tpu.memory_space<vmem>>, vector<128x32xf32>
    %1 = arith.truncf %0 : vector<128x32xf32> to vector<128x32xbf16>
    %c0_1 = arith.constant 0 : index
    %c0_2 = arith.constant 0 : index
    %2 = vector.load %arg4[%c0_1, %c0_2] : memref<32x32xbf16, #tpu.memory_space<vmem>>, vector<32x32xbf16>
    %cst = arith.constant dense<0.000000e+00> : vector<128x32xf32>
    %3 = tpu.matmul %1, %2, %cst {dimension_numbers = #tpu.dot_dimension_numbers<[1], [0], [0], [1], [0, 0, 1, 1], [], []>} : vector<128x32xbf16>, vector<32x32xbf16>, vector<128x32xf32> -> vector<128x32xf32>
    %4 = vector.shape_cast %3 : vector<128x32xf32> to vector<8x16x32xf32>
    %5 = arith.truncf %4 : vector<8x16x32xf32> to vector<8x16x32xbf16>
    %c0_3 = arith.constant 0 : index
    %c0_4 = arith.constant 0 : index
    %c0_5 = arith.constant 0 : index
    %6 = vector.load %arg2[%c0_3, %c0_4, %c0_5] : memref<8x16x16xf32, #tpu.memory_space<vmem>>, vector<8x16x16xf32>
    %7 = arith.truncf %6 : vector<8x16x16xf32> to vector<8x16x16xbf16>
    "tpu.trace_start"() <{level = 10 : i32, message = "bij,bjf->bif"}> : () -> ()
    %cst_6 = arith.constant dense<0.000000e+00> : vector<8x16x32xf32>
    %8 = tpu.matmul %7, %5, %cst_6 {dimension_numbers = #tpu.dot_dimension_numbers<[2], [1], [1], [2], [0, 0, 0, 1, 1, 2], [0], [0]>} : vector<8x16x16xbf16>, vector<8x16x32xbf16>, vector<8x16x32xf32> -> vector<8x16x32xf32>
    "tpu.trace_stop"() : () -> ()
    %c0_7 = arith.constant 0 : index
    %c0_8 = arith.constant 0 : index
    %9 = vector.load %arg3[%c0_7, %c0_8] : memref<32x32xbf16, #tpu.memory_space<vmem>>, vector<32x32xbf16>
    %cst_9 = arith.constant dense<0.000000e+00> : vector<128x32xf32>
    %10 = tpu.matmul %1, %9, %cst_9 {dimension_numbers = #tpu.dot_dimension_numbers<[1], [0], [0], [1], [0, 0, 1, 1], [], []>} : vector<128x32xbf16>, vector<32x32xbf16>, vector<128x32xf32> -> vector<128x32xf32>
    %11 = vector.shape_cast %10 : vector<128x32xf32> to vector<8x16x32xf32>
    %12 = arith.addf %11, %8 : vector<8x16x32xf32>
    %c0_10 = arith.constant 0 : index
    %c0_11 = arith.constant 0 : index
    %13 = vector.load %arg5[%c0_10, %c0_11] : memref<1x32xf32, #tpu.memory_space<vmem>>, vector<1x32xf32>
    %14 = vector.shape_cast %13 : vector<1x32xf32> to vector<1x1x32xf32>
    %15 = vector.broadcast %14 : vector<1x1x32xf32> to vector<8x16x32xf32>
    %16 = arith.addf %12, %15 : vector<8x16x32xf32>
    %cst_12 = arith.constant 0.000000e+00 : f32
    %17 = vector.broadcast %cst_12 : f32 to vector<8x16x32xf32>
    %18 = arith.maximumf %16, %17 : vector<8x16x32xf32>
    %c0_13 = arith.constant 0 : index
    %c0_14 = arith.constant 0 : index
    %c0_15 = arith.constant 0 : index
    %19 = vector.load %arg6[%c0_13, %c0_14, %c0_15] : memref<8x16x32xf32, #tpu.memory_space<vmem>>, vector<8x16x32xf32>
    tpu.vector_store %arg6[%c0_13, %c0_14, %c0_15], %18 {strides = array<i32>} : memref<8x16x32xf32, #tpu.memory_space<vmem>>, vector<8x16x32xf32>,
    return
  }
  func.func @transform_0(%arg0: i32) -> (i32, i32) {
    %c0_i32 = arith.constant 0 : i32
    %c0_i32_0 = arith.constant 0 : i32
    return %arg0, %c0_i32 : i32, i32
  }
  func.func @transform_1(%arg0: i32) -> (i32, i32, i32) {
    %c0_i32 = arith.constant 0 : i32
    %c0_i32_0 = arith.constant 0 : i32
    %c0_i32_1 = arith.constant 0 : i32
    return %arg0, %c0_i32, %c0_i32_0 : i32, i32, i32
  }
  func.func @transform_2(%arg0: i32) -> (i32, i32) {
    %c0_i32 = arith.constant 0 : i32
    %c0_i32_0 = arith.constant 0 : i32
    %c0_i32_1 = arith.constant 0 : i32
    return %c0_i32, %c0_i32_0 : i32, i32
  }
  func.func @transform_3(%arg0: i32) -> (i32, i32) {
    %c0_i32 = arith.constant 0 : i32
    %c0_i32_0 = arith.constant 0 : i32
    %c0_i32_1 = arith.constant 0 : i32
    return %c0_i32, %c0_i32_0 : i32, i32
  }
  func.func @transform_4(%arg0: i32) -> (i32, i32) {
    %c0_i32 = arith.constant 0 : i32
    %c0_i32_0 = arith.constant 0 : i32
    %c0_i32_1 = arith.constant 0 : i32
    return %c0_i32, %c0_i32_0 : i32, i32
  }
  func.func @transform_5(%arg0: i32) -> (i32, i32, i32) {
    %c0_i32 = arith.constant 0 : i32
    %c0_i32_0 = arith.constant 0 : i32
    %c0_i32_1 = arith.constant 0 : i32
    return %arg0, %c0_i32, %c0_i32_0 : i32, i32, i32
  }
}

</mosaic_0001>

<llo_original>
// kernel: tpu_custom_call.1
$region0: #{tpu_custom_call.1}
  #allocation0 [shape = 'u32[]', space=smem, size = 0x4, offset = 0x4, fixed_abs, tag = 'smem constant byte address 0x4 - core index']
  #allocation1 [shape = 'u32[144,128]{1,0:T(1,128)}', space=vmem, size = 0x12000, scoped, tag = 'internal scratch']
  %s0 = inlined_call_operand.vmem [shape: f32[128,32], index: 0, kind: input, shape index: {}]
  %s1 = inlined_call_operand.vmem [shape: f32[8,16,16], index: 1, kind: input, shape index: {}]
  %s2 = inlined_call_operand.vmem [shape: bf16[32,32], index: 2, kind: input, shape index: {}]
  %s3 = inlined_call_operand.vmem [shape: bf16[32,32], index: 3, kind: input, shape index: {}]
  %s4 = inlined_call_operand.vmem [shape: f32[1,32], index: 4, kind: input, shape index: {}]
  %s5 = inlined_call_operand.hbm [shape: f32[8,16,32], index: 5, kind: output, shape index: {}]
  %s6 = sld [smem:[#allocation0]]
  $region30: #{tpu_custom_call.1} parent=0
    _
  %s8 = ssub.s32 1, %s6
  %s9 = scalar_select 0, %s8, %s6
  $region1: #{tpu_custom_call.1} parent=0
    #allocation2 [shape = 'u8[65536]{0}', space=vmem, size = 0x10000, scoped, tag = 'output window, operand 0, single buffered']
    #allocation3 [shape = 's32[1]{0}', space=sflag, size = 0x4, scoped, tag = 'scoped memory for tpu_custom_call.1']
    %10 = vsyncpa [#allocation3], 0
    // Predicated region
    $region2: #{tpu_custom_call.1} parent=1 // pred_check
      _
    $region3: #{tpu_custom_call.1} parent=1 // pred_check_branch
      %12 = sbr.rel (0) target = $region5
    $region4: #{tpu_custom_call.1} parent=1 // pred_region
      _
    $region5: #{tpu_custom_call.1} parent=1 // pred_fallthru
      _
    // Predicated region
    $region6: #{tpu_custom_call.1} parent=1 // pred_check
      _
    $region7: #{tpu_custom_call.1} parent=1 // pred_check_branch
      %14 = sbr.rel (0) target = $region9
    $region8: #{tpu_custom_call.1} parent=1 // pred_region
      _
    $region9: #{tpu_custom_call.1} parent=1 // pred_fallthru
      _
    // Predicated region
    $region10: #{tpu_custom_call.1} parent=1 // pred_check
      _
    $region11: #{tpu_custom_call.1} parent=1 // pred_check_branch
      %16 = sbr.rel (0) target = $region13
    $region12: #{tpu_custom_call.1} parent=1 // pred_region
      _
    $region13: #{tpu_custom_call.1} parent=1 // pred_fallthru
      _
    // Predicated region
    $region14: #{tpu_custom_call.1} parent=1 // pred_check
      _
    $region15: #{tpu_custom_call.1} parent=1 // pred_check_branch
      %18 = sbr.rel (0) target = $region17
    $region16: #{tpu_custom_call.1} parent=1 // pred_region
      _
    $region17: #{tpu_custom_call.1} parent=1 // pred_fallthru
      _
    // Predicated region
    $region18: #{tpu_custom_call.1} parent=1 // pred_check
      _
    $region19: #{tpu_custom_call.1} parent=1 // pred_check_branch
      %20 = sbr.rel (0) target = $region21
    $region20: #{tpu_custom_call.1} parent=1 // pred_region
      _
    $region21: #{tpu_custom_call.1} parent=1 // pred_fallthru
      _
    %v22 = vld [vmem:[%s0] sm:$0xff]
    %v23 = vld [vmem:[%s0 + $0x8] sm:$0xff]
    %v24 = vld [vmem:[%s0 + $0x10] sm:$0xff]
    %v25 = vld [vmem:[%s0 + $0x18] sm:$0xff]
    %v26 = vld [vmem:[%s0 + $0x20] sm:$0xff]
    %v27 = vld [vmem:[%s0 + $0x28] sm:$0xff]
    %v28 = vld [vmem:[%s0 + $0x30] sm:$0xff]
    %v29 = vld [vmem:[%s0 + $0x38] sm:$0xff]
    %v30 = vld [vmem:[%s0 + $0x40] sm:$0xff]
    %v31 = vld [vmem:[%s0 + $0x48] sm:$0xff]
    %v32 = vld [vmem:[%s0 + $0x50] sm:$0xff]
    %v33 = vld [vmem:[%s0 + $0x58] sm:$0xff]
    %v34 = vld [vmem:[%s0 + $0x60] sm:$0xff]
    %v35 = vld [vmem:[%s0 + $0x68] sm:$0xff]
    %v36 = vld [vmem:[%s0 + $0x70] sm:$0xff]
    %v37 = vld [vmem:[%s0 + $0x78] sm:$0xff]
    %v38 = vpack.c.bf16 %v23, %v22
    %v39 = vpack.c.bf16 %v25, %v24
    %v40 = vpack.c.bf16 %v27, %v26
    %v41 = vpack.c.bf16 %v29, %v28
    %v42 = vpack.c.bf16 %v31, %v30
    %v43 = vpack.c.bf16 %v33, %v32
    %v44 = vpack.c.bf16 %v35, %v34
    %v45 = vpack.c.bf16 %v37, %v36
    %v46 = vld [vmem:[%s3] sm:$0xf]
    %v47 = vld [vmem:[%s3 + $0x4] sm:$0xf]
    %v48 = vld [vmem:[%s3 + $0x8] sm:$0xf]
    %v49 = vld [vmem:[%s3 + $0xc] sm:$0xf]
    %v54 = vunpack.c.l.b16 %v46
    %v55 = vunpack.c.l.b16 %v47
    %v56 = vunpack.c.l.b16 %v48
    %v57 = vunpack.c.l.b16 %v49
    %v58 = vpack.c.b16 %v55, %v54
    %v59 = vpack.c.b16 %v57, %v56
    %vm62 = vcmask 261120
    %v64 = vsel %vm62, %v38, 0
    %v67 = vsel %vm62, %v39, 0
    %v70 = vsel %vm62, %v40, 0
    %v73 = vsel %vm62, %v41, 0
    %v76 = vsel %vm62, %v42, 0
    %v79 = vsel %vm62, %v43, 0
    %v82 = vsel %vm62, %v44, 0
    %v85 = vsel %vm62, %v45, 0
    %87 = vmatprep.subr.bf16.mxu0 0
    %88 = vmatpush1.bf16.msra.mxu0 %v58
    %89 = vmatprep.subr.bf16.mxu0 0
    %90 = vmatpush1.bf16.msra.mxu0 %v59
    %91 = vmatprep.subr.bf16.mxu0 0
    %92 = vmatpush1.bf16.msra.mxu0 0
    %93 = vmatprep.subr.bf16.mxu0 0
    %94 = vmatpush1.bf16.msra.mxu0 0
    %95 = vmatprep.subr.bf16.mxu0 0
    %96 = vmatpush1.bf16.msra.mxu0 0
    %97 = vmatprep.subr.bf16.mxu0 0
    %98 = vmatpush1.bf16.msra.mxu0 0
    %99 = vmatprep.subr.bf16.mxu0 0
    %100 = vmatpush1.bf16.msra.mxu0 0
    %101 = vmatprep.subr.bf16.mxu0 0
    %102 = vmatpush1.bf16.msra.mxu0 0
    %103 = vmatprep.subr.bf16.mxu0 0
    %104 = vmatpush1.bf16.msra.mxu0 0
    %105 = vmatprep.subr.bf16.mxu0 0
    %106 = vmatpush1.bf16.msra.mxu0 0
    %107 = vmatprep.subr.bf16.mxu0 0
    %108 = vmatpush1.bf16.msra.mxu0 0
    %109 = vmatprep.subr.bf16.mxu0 0
    %110 = vmatpush1.bf16.msra.mxu0 0
    %111 = vmatprep.subr.bf16.mxu0 0
    %112 = vmatpush1.bf16.msra.mxu0 0
    %113 = vmatprep.subr.bf16.mxu0 0
    %114 = vmatpush1.bf16.msra.mxu0 0
    %115 = vmatprep.subr.bf16.mxu0 0
    %116 = vmatpush1.bf16.msra.mxu0 0
    %117 = vmatprep.subr.bf16.mxu0 0
    %118 = vmatpush1.bf16.msra.mxu0 0
    %119 = vmatprep.mubr.bf16.mxu0 0
    %120 = vmatmul.mubr.bf16.gmra.mrb[0].mxu0 %v64
    %v121 = vpop.f32.mrb[0].mxu0
    %v122 = vadd.f32 0.0, %v121
    %v123 = vpop.f32.mrb[0].mxu0
    %v124 = vpop.f32.mrb[0].mxu0
    %v125 = vadd.f32 0.0, %v124
    %v126 = vpop.f32.mrb[0].mxu0
    %127 = vmatprep.mubr.bf16.mxu0 0
    %128 = vmatmul.mubr.bf16.gmra.mrb[0].mxu0 %v67
    %v129 = vpop.f32.mrb[0].mxu0
    %v130 = vadd.f32 0.0, %v129
    %v131 = vpop.f32.mrb[0].mxu0
    %v132 = vpop.f32.mrb[0].mxu0
    %v133 = vadd.f32 0.0, %v132
    %v134 = vpop.f32.mrb[0].mxu0
    %135 = vmatprep.mubr.bf16.mxu0 0
    %136 = vmatmul.mubr.bf16.gmra.mrb[0].mxu0 %v70
    %v137 = vpop.f32.mrb[0].mxu0
    %v138 = vadd.f32 0.0, %v137
    %v139 = vpop.f32.mrb[0].mxu0
    %v140 = vpop.f32.mrb[0].mxu0
    %v141 = vadd.f32 0.0, %v140
    %v142 = vpop.f32.mrb[0].mxu0
    %143 = vmatprep.mubr.bf16.mxu0 0
    %144 = vmatmul.mubr.bf16.gmra.mrb[0].mxu0 %v73
    %v145 = vpop.f32.mrb[0].mxu0
    %v146 = vadd.f32 0.0, %v145
    %v147 = vpop.f32.mrb[0].mxu0
    %v148 = vpop.f32.mrb[0].mxu0
    %v149 = vadd.f32 0.0, %v148
    %v150 = vpop.f32.mrb[0].mxu0
    %151 = vmatprep.mubr.bf16.mxu0 0
    %152 = vmatmul.mubr.bf16.gmra.mrb[0].mxu0 %v76
    %v153 = vpop.f32.mrb[0].mxu0
    %v154 = vadd.f32 0.0, %v153
    %v155 = vpop.f32.mrb[0].mxu0
    %v156 = vpop.f32.mrb[0].mxu0
    %v157 = vadd.f32 0.0, %v156
    %v158 = vpop.f32.mrb[0].mxu0
    %159 = vmatprep.mubr.bf16.mxu0 0
    %160 = vmatmul.mubr.bf16.gmra.mrb[0].mxu0 %v79
    %v161 = vpop.f32.mrb[0].mxu0
    %v162 = vadd.f32 0.0, %v161
    %v163 = vpop.f32.mrb[0].mxu0
    %v164 = vpop.f32.mrb[0].mxu0
    %v165 = vadd.f32 0.0, %v164
    %v166 = vpop.f32.mrb[0].mxu0
    %167 = vmatprep.mubr.bf16.mxu0 0
    %168 = vmatmul.mubr.bf16.gmra.mrb[0].mxu0 %v82
    %v169 = vpop.f32.mrb[0].mxu0
    %v170 = vadd.f32 0.0, %v169
    %v171 = vpop.f32.mrb[0].mxu0
    %v172 = vpop.f32.mrb[0].mxu0
    %v173 = vadd.f32 0.0, %v172
    %v174 = vpop.f32.mrb[0].mxu0
    %175 = vmatprep.mubr.bf16.mxu0 0
    %176 = vmatmul.mubr.bf16.gmra.mrb[0].mxu0 %v85
    %v177 = vpop.f32.mrb[0].mxu0
    %v178 = vadd.f32 0.0, %v177
    %v179 = vpop.f32.mrb[0].mxu0
    %v180 = vpop.f32.mrb[0].mxu0
    %v181 = vadd.f32 0.0, %v180
    %v182 = vpop.f32.mrb[0].mxu0
    %183 = vdwg.mxu0
    %v184 = vpack.c.bf16 %v125, %v122
    %v185 = vpack.c.bf16 %v133, %v130
    %v186 = vpack.c.bf16 %v141, %v138
    %v187 = vpack.c.bf16 %v149, %v146
    %v188 = vpack.c.bf16 %v157, %v154
    %v189 = vpack.c.bf16 %v165, %v162
    %v190 = vpack.c.bf16 %v173, %v170
    %v191 = vpack.c.bf16 %v181, %v178
    %v192 = vld [vmem:[%s1] sm:$0xff]
    %v193 = vld [vmem:[%s1 + $0x8] sm:$0xff]
    %v194 = vld [vmem:[%s1 + $0x10] sm:$0xff]
    %v195 = vld [vmem:[%s1 + $0x18] sm:$0xff]
    %v196 = vld [vmem:[%s1 + $0x20] sm:$0xff]
    %v197 = vld [vmem:[%s1 + $0x28] sm:$0xff]
    %v198 = vld [vmem:[%s1 + $0x30] sm:$0xff]
    %v199 = vld [vmem:[%s1 + $0x38] sm:$0xff]
    %v200 = vld [vmem:[%s1 + $0x40] sm:$0xff]
    %v201 = vld [vmem:[%s1 + $0x48] sm:$0xff]
    %v202 = vld [vmem:[%s1 + $0x50] sm:$0xff]
    %v203 = vld [vmem:[%s1 + $0x58] sm:$0xff]
    %v204 = vld [vmem:[%s1 + $0x60] sm:$0xff]
    %v205 = vld [vmem:[%s1 + $0x68] sm:$0xff]
    %v206 = vld [vmem:[%s1 + $0x70] sm:$0xff]
    %v207 = vld [vmem:[%s1 + $0x78] sm:$0xff]
    %v208 = vpack.c.bf16 %v193, %v192
    %v209 = vpack.c.bf16 %v195, %v194
    %v210 = vpack.c.bf16 %v197, %v196
    %v211 = vpack.c.bf16 %v199, %v198
    %v212 = vpack.c.bf16 %v201, %v200
    %v213 = vpack.c.bf16 %v203, %v202
    %v214 = vpack.c.bf16 %v205, %v204
    %v215 = vpack.c.bf16 %v207, %v206
    %vm216 = vcmask 130048
    %v218 = vsel %vm216, %v208, 0
    %220 = vmatprep.subr.bf16.mxu0 0
    %221 = vmatpush1.bf16.msra.mxu0 %v184
    %222 = vmatprep.subr.bf16.mxu0 0
    %223 = vmatpush1.bf16.msra.mxu0 0
    %224 = vmatprep.subr.bf16.mxu0 0
    %225 = vmatpush1.bf16.msra.mxu0 0
    %226 = vmatprep.subr.bf16.mxu0 0
    %227 = vmatpush1.bf16.msra.mxu0 0
    %228 = vmatprep.subr.bf16.mxu0 0
    %229 = vmatpush1.bf16.msra.mxu0 0
    %230 = vmatprep.subr.bf16.mxu0 0
    %231 = vmatpush1.bf16.msra.mxu0 0
    %232 = vmatprep.subr.bf16.mxu0 0
    %233 = vmatpush1.bf16.msra.mxu0 0
    %234 = vmatprep.subr.bf16.mxu0 0
    %235 = vmatpush1.bf16.msra.mxu0 0
    %236 = vmatprep.subr.bf16.mxu0 0
    %237 = vmatpush1.bf16.msra.mxu0 0
    %238 = vmatprep.subr.bf16.mxu0 0
    %239 = vmatpush1.bf16.msra.mxu0 0
    %240 = vmatprep.subr.bf16.mxu0 0
    %241 = vmatpush1.bf16.msra.mxu0 0
    %242 = vmatprep.subr.bf16.mxu0 0
    %243 = vmatpush1.bf16.msra.mxu0 0
    %244 = vmatprep.subr.bf16.mxu0 0
    %245 = vmatpush1.bf16.msra.mxu0 0
    %246 = vmatprep.subr.bf16.mxu0 0
    %247 = vmatpush1.bf16.msra.mxu0 0
    %248 = vmatprep.subr.bf16.mxu0 0
    %249 = vmatpush1.bf16.msra.mxu0 0
    %250 = vmatprep.subr.bf16.mxu0 0
    %251 = vmatpush1.bf16.msra.mxu0 0
    %252 = vmatprep.mubr.bf16.mxu0 0
    %253 = vmatmul.mubr.bf16.gmra.mrb[0].mxu0 %v218
    %v254 = vpop.f32.mrb[0].mxu0
    %v255 = vadd.f32 0.0, %v254
    %v256 = vpop.f32.mrb[0].mxu0
    %v257 = vpop.f32.mrb[0].mxu0
    %v258 = vadd.f32 0.0, %v257
    %v259 = vpop.f32.mrb[0].mxu0
    %260 = vdwg.mxu0
    %v262 = vsel %vm216, %v209, 0
    %264 = vmatprep.subr.bf16.mxu0 0
    %265 = vmatpush1.bf16.msra.mxu0 %v185
    %266 = vmatprep.subr.bf16.mxu0 0
    %267 = vmatpush1.bf16.msra.mxu0 0
    %268 = vmatprep.subr.bf16.mxu0 0
    %269 = vmatpush1.bf16.msra.mxu0 0
    %270 = vmatprep.subr.bf16.mxu0 0
    %271 = vmatpush1.bf16.msra.mxu0 0
    %272 = vmatprep.subr.bf16.mxu0 0
    %273 = vmatpush1.bf16.msra.mxu0 0
    %274 = vmatprep.subr.bf16.mxu0 0
    %275 = vmatpush1.bf16.msra.mxu0 0
    %276 = vmatprep.subr.bf16.mxu0 0
    %277 = vmatpush1.bf16.msra.mxu0 0
    %278 = vmatprep.subr.bf16.mxu0 0
    %279 = vmatpush1.bf16.msra.mxu0 0
    %280 = vmatprep.subr.bf16.mxu0 0
    %281 = vmatpush1.bf16.msra.mxu0 0
    %282 = vmatprep.subr.bf16.mxu0 0
    %283 = vmatpush1.bf16.msra.mxu0 0
    %284 = vmatprep.subr.bf16.mxu0 0
    %285 = vmatpush1.bf16.msra.mxu0 0
    %286 = vmatprep.subr.bf16.mxu0 0
    %287 = vmatpush1.bf16.msra.mxu0 0
    %288 = vmatprep.subr.bf16.mxu0 0
    %289 = vmatpush1.bf16.msra.mxu0 0
    %290 = vmatprep.subr.bf16.mxu0 0
    %291 = vmatpush1.bf16.msra.mxu0 0
    %292 = vmatprep.subr.bf16.mxu0 0
    %293 = vmatpush1.bf16.msra.mxu0 0
    %294 = vmatprep.subr.bf16.mxu0 0
    %295 = vmatpush1.bf16.msra.mxu0 0
    %296 = vmatprep.mubr.bf16.mxu0 0
    %297 = vmatmul.mubr.bf16.gmra.mrb[0].mxu0 %v262
    %v298 = vpop.f32.mrb[0].mxu0
    %v299 = vadd.f32 0.0, %v298
    %v300 = vpop.f32.mrb[0].mxu0
    %v301 = vpop.f32.mrb[0].mxu0
    %v302 = vadd.f32 0.0, %v301
    %v303 = vpop.f32.mrb[0].mxu0
    %304 = vdwg.mxu0
    %v306 = vsel %vm216, %v210, 0
    %308 = vmatprep.subr.bf16.mxu0 0
    %309 = vmatpush1.bf16.msra.mxu0 %v186
    %310 = vmatprep.subr.bf16.mxu0 0
    %311 = vmatpush1.bf16.msra.mxu0 0
    %312 = vmatprep.subr.bf16.mxu0 0
    %313 = vmatpush1.bf16.msra.mxu0 0
    %314 = vmatprep.subr.bf16.mxu0 0
    %315 = vmatpush1.bf16.msra.mxu0 0
    %316 = vmatprep.subr.bf16.mxu0 0
    %317 = vmatpush1.bf16.msra.mxu0 0
    %318 = vmatprep.subr.bf16.mxu0 0
    %319 = vmatpush1.bf16.msra.mxu0 0
    %320 = vmatprep.subr.bf16.mxu0 0
    %321 = vmatpush1.bf16.msra.mxu0 0
    %322 = vmatprep.subr.bf16.mxu0 0
    %323 = vmatpush1.bf16.msra.mxu0 0
    %324 = vmatprep.subr.bf16.mxu0 0
    %325 = vmatpush1.bf16.msra.mxu0 0
    %326 = vmatprep.subr.bf16.mxu0 0
    %327 = vmatpush1.bf16.msra.mxu0 0
    %328 = vmatprep.subr.bf16.mxu0 0
    %329 = vmatpush1.bf16.msra.mxu0 0
    %330 = vmatprep.subr.bf16.mxu0 0
    %331 = vmatpush1.bf16.msra.mxu0 0
    %332 = vmatprep.subr.bf16.mxu0 0
    %333 = vmatpush1.bf16.msra.mxu0 0
    %334 = vmatprep.subr.bf16.mxu0 0
    %335 = vmatpush1.bf16.msra.mxu0 0
    %336 = vmatprep.subr.bf16.mxu0 0
    %337 = vmatpush1.bf16.msra.mxu0 0
    %338 = vmatprep.subr.bf16.mxu0 0
    %339 = vmatpush1.bf16.msra.mxu0 0
    %340 = vmatprep.mubr.bf16.mxu0 0
    %341 = vmatmul.mubr.bf16.gmra.mrb[0].mxu0 %v306
    %v342 = vpop.f32.mrb[0].mxu0
    %v343 = vadd.f32 0.0, %v342
    %v344 = vpop.f32.mrb[0].mxu0
    %v345 = vpop.f32.mrb[0].mxu0
    %v346 = vadd.f32 0.0, %v345
    %v347 = vpop.f32.mrb[0].mxu0
    %348 = vdwg.mxu0
    %v350 = vsel %vm216, %v211, 0
    %352 = vmatprep.subr.bf16.mxu0 0
    %353 = vmatpush1.bf16.msra.mxu0 %v187
    %354 = vmatprep.subr.bf16.mxu0 0
    %355 = vmatpush1.bf16.msra.mxu0 0
    %356 = vmatprep.subr.bf16.mxu0 0
    %357 = vmatpush1.bf16.msra.mxu0 0
    %358 = vmatprep.subr.bf16.mxu0 0
    %359 = vmatpush1.bf16.msra.mxu0 0
    %360 = vmatprep.subr.bf16.mxu0 0
    %361 = vmatpush1.bf16.msra.mxu0 0
    %362 = vmatprep.subr.bf16.mxu0 0
    %363 = vmatpush1.bf16.msra.mxu0 0
    %364 = vmatprep.subr.bf16.mxu0 0
    %365 = vmatpush1.bf16.msra.mxu0 0
    %366 = vmatprep.subr.bf16.mxu0 0
    %367 = vmatpush1.bf16.msra.mxu0 0
    %368 = vmatprep.subr.bf16.mxu0 0
    %369 = vmatpush1.bf16.msra.mxu0 0
    %370 = vmatprep.subr.bf16.mxu0 0
    %371 = vmatpush1.bf16.msra.mxu0 0
    %372 = vmatprep.subr.bf16.mxu0 0
    %373 = vmatpush1.bf16.msra.mxu0 0
    %374 = vmatprep.subr.bf16.mxu0 0
    %375 = vmatpush1.bf16.msra.mxu0 0
    %376 = vmatprep.subr.bf16.mxu0 0
    %377 = vmatpush1.bf16.msra.mxu0 0
    %378 = vmatprep.subr.bf16.mxu0 0
    %379 = vmatpush1.bf16.msra.mxu0 0
    %380 = vmatprep.subr.bf16.mxu0 0
    %381 = vmatpush1.bf16.msra.mxu0 0
    %382 = vmatprep.subr.bf16.mxu0 0
    %383 = vmatpush1.bf16.msra.mxu0 0
    %384 = vmatprep.mubr.bf16.mxu0 0
    %385 = vmatmul.mubr.bf16.gmra.mrb[0].mxu0 %v350
    %v386 = vpop.f32.mrb[0].mxu0
    %v387 = vadd.f32 0.0, %v386
    %v388 = vpop.f32.mrb[0].mxu0
    %v389 = vpop.f32.mrb[0].mxu0
    %v390 = vadd.f32 0.0, %v389
    %v391 = vpop.f32.mrb[0].mxu0
    %392 = vdwg.mxu0
    %v394 = vsel %vm216, %v212, 0
    %396 = vmatprep.subr.bf16.mxu0 0
    %397 = vmatpush1.bf16.msra.mxu0 %v188
    %398 = vmatprep.subr.bf16.mxu0 0
    %399 = vmatpush1.bf16.msra.mxu0 0
    %400 = vmatprep.subr.bf16.mxu0 0
    %401 = vmatpush1.bf16.msra.mxu0 0
    %402 = vmatprep.subr.bf16.mxu0 0
    %403 = vmatpush1.bf16.msra.mxu0 0
    %404 = vmatprep.subr.bf16.mxu0 0
    %405 = vmatpush1.bf16.msra.mxu0 0
    %406 = vmatprep.subr.bf16.mxu0 0
    %407 = vmatpush1.bf16.msra.mxu0 0
    %408 = vmatprep.subr.bf16.mxu0 0
    %409 = vmatpush1.bf16.msra.mxu0 0
    %410 = vmatprep.subr.bf16.mxu0 0
    %411 = vmatpush1.bf16.msra.mxu0 0
    %412 = vmatprep.subr.bf16.mxu0 0
    %413 = vmatpush1.bf16.msra.mxu0 0
    %414 = vmatprep.subr.bf16.mxu0 0
    %415 = vmatpush1.bf16.msra.mxu0 0
    %416 = vmatprep.subr.bf16.mxu0 0
    %417 = vmatpush1.bf16.msra.mxu0 0
    %418 = vmatprep.subr.bf16.mxu0 0
    %419 = vmatpush1.bf16.msra.mxu0 0
    %420 = vmatprep.subr.bf16.mxu0 0
    %421 = vmatpush1.bf16.msra.mxu0 0
    %422 = vmatprep.subr.bf16.mxu0 0
    %423 = vmatpush1.bf16.msra.mxu0 0
    %424 = vmatprep.subr.bf16.mxu0 0
    %425 = vmatpush1.bf16.msra.mxu0 0
    %426 = vmatprep.subr.bf16.mxu0 0
    %427 = vmatpush1.bf16.msra.mxu0 0
    %428 = vmatprep.mubr.bf16.mxu0 0
    %429 = vmatmul.mubr.bf16.gmra.mrb[0].mxu0 %v394
    %v430 = vpop.f32.mrb[0].mxu0
    %v431 = vadd.f32 0.0, %v430
    %v432 = vpop.f32.mrb[0].mxu0
    %v433 = vpop.f32.mrb[0].mxu0
    %v434 = vadd.f32 0.0, %v433
    %v435 = vpop.f32.mrb[0].mxu0
    %436 = vdwg.mxu0
    %v438 = vsel %vm216, %v213, 0
    %440 = vmatprep.subr.bf16.mxu0 0
    %441 = vmatpush1.bf16.msra.mxu0 %v189
    %442 = vmatprep.subr.bf16.mxu0 0
    %443 = vmatpush1.bf16.msra.mxu0 0
    %444 = vmatprep.subr.bf16.mxu0 0
    %445 = vmatpush1.bf16.msra.mxu0 0
    %446 = vmatprep.subr.bf16.mxu0 0
    %447 = vmatpush1.bf16.msra.mxu0 0
    %448 = vmatprep.subr.bf16.mxu0 0
    %449 = vmatpush1.bf16.msra.mxu0 0
    %450 = vmatprep.subr.bf16.mxu0 0
    %451 = vmatpush1.bf16.msra.mxu0 0
    %452 = vmatprep.subr.bf16.mxu0 0
    %453 = vmatpush1.bf16.msra.mxu0 0
    %454 = vmatprep.subr.bf16.mxu0 0
    %455 = vmatpush1.bf16.msra.mxu0 0
    %456 = vmatprep.subr.bf16.mxu0 0
    %457 = vmatpush1.bf16.msra.mxu0 0
    %458 = vmatprep.subr.bf16.mxu0 0
    %459 = vmatpush1.bf16.msra.mxu0 0
    %460 = vmatprep.subr.bf16.mxu0 0
    %461 = vmatpush1.bf16.msra.mxu0 0
    %462 = vmatprep.subr.bf16.mxu0 0
    %463 = vmatpush1.bf16.msra.mxu0 0
    %464 = vmatprep.subr.bf16.mxu0 0
    %465 = vmatpush1.bf16.msra.mxu0 0
    %466 = vmatprep.subr.bf16.mxu0 0
    %467 = vmatpush1.bf16.msra.mxu0 0
    %468 = vmatprep.subr.bf16.mxu0 0
    %469 = vmatpush1.bf16.msra.mxu0 0
    %470 = vmatprep.subr.bf16.mxu0 0
    %471 = vmatpush1.bf16.msra.mxu0 0
    %472 = vmatprep.mubr.bf16.mxu0 0
    %473 = vmatmul.mubr.bf16.gmra.mrb[0].mxu0 %v438
    %v474 = vpop.f32.mrb[0].mxu0
    %v475 = vadd.f32 0.0, %v474
    %v476 = vpop.f32.mrb[0].mxu0
    %v477 = vpop.f32.mrb[0].mxu0
    %v478 = vadd.f32 0.0, %v477
    %v479 = vpop.f32.mrb[0].mxu0
    %480 = vdwg.mxu0
    %v482 = vsel %vm216, %v214, 0
    %484 = vmatprep.subr.bf16.mxu0 0
    %485 = vmatpush1.bf16.msra.mxu0 %v190
    %486 = vmatprep.subr.bf16.mxu0 0
    %487 = vmatpush1.bf16.msra.mxu0 0
    %488 = vmatprep.subr.bf16.mxu0 0
    %489 = vmatpush1.bf16.msra.mxu0 0
    %490 = vmatprep.subr.bf16.mxu0 0
    %491 = vmatpush1.bf16.msra.mxu0 0
    %492 = vmatprep.subr.bf16.mxu0 0
    %493 = vmatpush1.bf16.msra.mxu0 0
    %494 = vmatprep.subr.bf16.mxu0 0
    %495 = vmatpush1.bf16.msra.mxu0 0
    %496 = vmatprep.subr.bf16.mxu0 0
    %497 = vmatpush1.bf16.msra.mxu0 0
    %498 = vmatprep.subr.bf16.mxu0 0
    %499 = vmatpush1.bf16.msra.mxu0 0
    %500 = vmatprep.subr.bf16.mxu0 0
    %501 = vmatpush1.bf16.msra.mxu0 0
    %502 = vmatprep.subr.bf16.mxu0 0
    %503 = vmatpush1.bf16.msra.mxu0 0
    %504 = vmatprep.subr.bf16.mxu0 0
    %505 = vmatpush1.bf16.msra.mxu0 0
    %506 = vmatprep.subr.bf16.mxu0 0
    %507 = vmatpush1.bf16.msra.mxu0 0
    %508 = vmatprep.subr.bf16.mxu0 0
    %509 = vmatpush1.bf16.msra.mxu0 0
    %510 = vmatprep.subr.bf16.mxu0 0
    %511 = vmatpush1.bf16.msra.mxu0 0
    %512 = vmatprep.subr.bf16.mxu0 0
    %513 = vmatpush1.bf16.msra.mxu0 0
    %514 = vmatprep.subr.bf16.mxu0 0
    %515 = vmatpush1.bf16.msra.mxu0 0
    %516 = vmatprep.mubr.bf16.mxu0 0
    %517 = vmatmul.mubr.bf16.gmra.mrb[0].mxu0 %v482
    %v518 = vpop.f32.mrb[0].mxu0
    %v519 = vadd.f32 0.0, %v518
    %v520 = vpop.f32.mrb[0].mxu0
    %v521 = vpop.f32.mrb[0].mxu0
    %v522 = vadd.f32 0.0, %v521
    %v523 = vpop.f32.mrb[0].mxu0
    %524 = vdwg.mxu0
    %v526 = vsel %vm216, %v215, 0
    %528 = vmatprep.subr.bf16.mxu0 0
    %529 = vmatpush1.bf16.msra.mxu0 %v191
    %530 = vmatprep.subr.bf16.mxu0 0
    %531 = vmatpush1.bf16.msra.mxu0 0
    %532 = vmatprep.subr.bf16.mxu0 0
    %533 = vmatpush1.bf16.msra.mxu0 0
    %534 = vmatprep.subr.bf16.mxu0 0
    %535 = vmatpush1.bf16.msra.mxu0 0
    %536 = vmatprep.subr.bf16.mxu0 0
    %537 = vmatpush1.bf16.msra.mxu0 0
    %538 = vmatprep.subr.bf16.mxu0 0
    %539 = vmatpush1.bf16.msra.mxu0 0
    %540 = vmatprep.subr.bf16.mxu0 0
    %541 = vmatpush1.bf16.msra.mxu0 0
    %542 = vmatprep.subr.bf16.mxu0 0
    %543 = vmatpush1.bf16.msra.mxu0 0
    %544 = vmatprep.subr.bf16.mxu0 0
    %545 = vmatpush1.bf16.msra.mxu0 0
    %546 = vmatprep.subr.bf16.mxu0 0
    %547 = vmatpush1.bf16.msra.mxu0 0
    %548 = vmatprep.subr.bf16.mxu0 0
    %549 = vmatpush1.bf16.msra.mxu0 0
    %550 = vmatprep.subr.bf16.mxu0 0
    %551 = vmatpush1.bf16.msra.mxu0 0
    %552 = vmatprep.subr.bf16.mxu0 0
    %553 = vmatpush1.bf16.msra.mxu0 0
    %554 = vmatprep.subr.bf16.mxu0 0
    %555 = vmatpush1.bf16.msra.mxu0 0
    %556 = vmatprep.subr.bf16.mxu0 0
    %557 = vmatpush1.bf16.msra.mxu0 0
    %558 = vmatprep.subr.bf16.mxu0 0
    %559 = vmatpush1.bf16.msra.mxu0 0
    %560 = vmatprep.mubr.bf16.mxu0 0
    %561 = vmatmul.mubr.bf16.gmra.mrb[0].mxu0 %v526
    %v562 = vpop.f32.mrb[0].mxu0
    %v563 = vadd.f32 0.0, %v562
    %v564 = vpop.f32.mrb[0].mxu0
    %v565 = vpop.f32.mrb[0].mxu0
    %v566 = vadd.f32 0.0, %v565
    %v567 = vpop.f32.mrb[0].mxu0
    %568 = vdwg.mxu0
    %v569 = vld [vmem:[%s2] sm:$0xf]
    %v570 = vld [vmem:[%s2 + $0x4] sm:$0xf]
    %v571 = vld [vmem:[%s2 + $0x8] sm:$0xf]
    %v572 = vld [vmem:[%s2 + $0xc] sm:$0xf]
    %v577 = vunpack.c.l.b16 %v569
    %v578 = vunpack.c.l.b16 %v570
    %v579 = vunpack.c.l.b16 %v571
    %v580 = vunpack.c.l.b16 %v572
    %v581 = vpack.c.b16 %v578, %v577
    %v582 = vpack.c.b16 %v580, %v579
    %585 = vmatprep.subr.bf16.mxu0 0
    %586 = vmatpush1.bf16.msra.mxu0 %v581
    %587 = vmatprep.subr.bf16.mxu0 0
    %588 = vmatpush1.bf16.msra.mxu0 %v582
    %589 = vmatprep.subr.bf16.mxu0 0
    %590 = vmatpush1.bf16.msra.mxu0 0
    %591 = vmatprep.subr.bf16.mxu0 0
    %592 = vmatpush1.bf16.msra.mxu0 0
    %593 = vmatprep.subr.bf16.mxu0 0
    %594 = vmatpush1.bf16.msra.mxu0 0
    %595 = vmatprep.subr.bf16.mxu0 0
    %596 = vmatpush1.bf16.msra.mxu0 0
    %597 = vmatprep.subr.bf16.mxu0 0
    %598 = vmatpush1.bf16.msra.mxu0 0
    %599 = vmatprep.subr.bf16.mxu0 0
    %600 = vmatpush1.bf16.msra.mxu0 0
    %601 = vmatprep.subr.bf16.mxu0 0
    %602 = vmatpush1.bf16.msra.mxu0 0
    %603 = vmatprep.subr.bf16.mxu0 0
    %604 = vmatpush1.bf16.msra.mxu0 0
    %605 = vmatprep.subr.bf16.mxu0 0
    %606 = vmatpush1.bf16.msra.mxu0 0
    %607 = vmatprep.subr.bf16.mxu0 0
    %608 = vmatpush1.bf16.msra.mxu0 0
    %609 = vmatprep.subr.bf16.mxu0 0
    %610 = vmatpush1.bf16.msra.mxu0 0
    %611 = vmatprep.subr.bf16.mxu0 0
    %612 = vmatpush1.bf16.msra.mxu0 0
    %613 = vmatprep.subr.bf16.mxu0 0
    %614 = vmatpush1.bf16.msra.mxu0 0
    %615 = vmatprep.subr.bf16.mxu0 0
    %616 = vmatpush1.bf16.msra.mxu0 0
    %617 = vmatprep.mubr.bf16.mxu0 0
    %618 = vmatmul.mubr.bf16.gmra.mrb[0].mxu0 %v64
    %v619 = vpop.f32.mrb[0].mxu0
    %v620 = vadd.f32 0.0, %v619
    %v621 = vpop.f32.mrb[0].mxu0
    %v622 = vpop.f32.mrb[0].mxu0
    %v623 = vadd.f32 0.0, %v622
    %v624 = vpop.f32.mrb[0].mxu0
    %625 = vmatprep.mubr.bf16.mxu0 0
    %626 = vmatmul.mubr.bf16.gmra.mrb[0].mxu0 %v67
    %v627 = vpop.f32.mrb[0].mxu0
    %v628 = vadd.f32 0.0, %v627
    %v629 = vpop.f32.mrb[0].mxu0
    %v630 = vpop.f32.mrb[0].mxu0
    %v631 = vadd.f32 0.0, %v630
    %v632 = vpop.f32.mrb[0].mxu0
    %633 = vmatprep.mubr.bf16.mxu0 0
    %634 = vmatmul.mubr.bf16.gmra.mrb[0].mxu0 %v70
    %v635 = vpop.f32.mrb[0].mxu0
    %v636 = vadd.f32 0.0, %v635
    %v637 = vpop.f32.mrb[0].mxu0
    %v638 = vpop.f32.mrb[0].mxu0
    %v639 = vadd.f32 0.0, %v638
    %v640 = vpop.f32.mrb[0].mxu0
    %641 = vmatprep.mubr.bf16.mxu0 0
    %642 = vmatmul.mubr.bf16.gmra.mrb[0].mxu0 %v73
    %v643 = vpop.f32.mrb[0].mxu0
    %v644 = vadd.f32 0.0, %v643
    %v645 = vpop.f32.mrb[0].mxu0
    %v646 = vpop.f32.mrb[0].mxu0
    %v647 = vadd.f32 0.0, %v646
    %v648 = vpop.f32.mrb[0].mxu0
    %649 = vmatprep.mubr.bf16.mxu0 0
    %650 = vmatmul.mubr.bf16.gmra.mrb[0].mxu0 %v76
    %v651 = vpop.f32.mrb[0].mxu0
    %v652 = vadd.f32 0.0, %v651
    %v653 = vpop.f32.mrb[0].mxu0
    %v654 = vpop.f32.mrb[0].mxu0
    %v655 = vadd.f32 0.0, %v654
    %v656 = vpop.f32.mrb[0].mxu0
    %657 = vmatprep.mubr.bf16.mxu0 0
    %658 = vmatmul.mubr.bf16.gmra.mrb[0].mxu0 %v79
    %v659 = vpop.f32.mrb[0].mxu0
    %v660 = vadd.f32 0.0, %v659
    %v661 = vpop.f32.mrb[0].mxu0
    %v662 = vpop.f32.mrb[0].mxu0
    %v663 = vadd.f32 0.0, %v662
    %v664 = vpop.f32.mrb[0].mxu0
    %665 = vmatprep.mubr.bf16.mxu0 0
    %666 = vmatmul.mubr.bf16.gmra.mrb[0].mxu0 %v82
    %v667 = vpop.f32.mrb[0].mxu0
    %v668 = vadd.f32 0.0, %v667
    %v669 = vpop.f32.mrb[0].mxu0
    %v670 = vpop.f32.mrb[0].mxu0
    %v671 = vadd.f32 0.0, %v670
    %v672 = vpop.f32.mrb[0].mxu0
    %673 = vmatprep.mubr.bf16.mxu0 0
    %674 = vmatmul.mubr.bf16.gmra.mrb[0].mxu0 %v85
    %v675 = vpop.f32.mrb[0].mxu0
    %v676 = vadd.f32 0.0, %v675
    %v677 = vpop.f32.mrb[0].mxu0
    %v678 = vpop.f32.mrb[0].mxu0
    %v679 = vadd.f32 0.0, %v678
    %v680 = vpop.f32.mrb[0].mxu0
    %681 = vdwg.mxu0
    %v682 = vadd.f32 %v620, %v255
    %v683 = vadd.f32 %v623, %v258
    %v684 = vadd.f32 %v628, %v299
    %v685 = vadd.f32 %v631, %v302
    %v686 = vadd.f32 %v636, %v343
    %v687 = vadd.f32 %v639, %v346
    %v688 = vadd.f32 %v644, %v387
    %v689 = vadd.f32 %v647, %v390
    %v690 = vadd.f32 %v652, %v431
    %v691 = vadd.f32 %v655, %v434
    %v692 = vadd.f32 %v660, %v475
    %v693 = vadd.f32 %v663, %v478
    %v694 = vadd.f32 %v668, %v519
    %v695 = vadd.f32 %v671, %v522
    %v696 = vadd.f32 %v676, %v563
    %v697 = vadd.f32 %v679, %v566
    %v698 = vld [vmem:[%s4] sm:$0x1]
    %v700 = vlaneseq
    %v701 = vshrl.u32 %v700, 7
    %v702 = vsub.s32 0, %v701
    %v703 = vrot.slane %v698, %v702
    %v705 = vadd.f32 %v682, %v703
    %v706 = vadd.f32 %v683, %v703
    %v707 = vadd.f32 %v684, %v703
    %v708 = vadd.f32 %v685, %v703
    %v709 = vadd.f32 %v686, %v703
    %v710 = vadd.f32 %v687, %v703
    %v711 = vadd.f32 %v688, %v703
    %v712 = vadd.f32 %v689, %v703
    %v713 = vadd.f32 %v690, %v703
    %v714 = vadd.f32 %v691, %v703
    %v715 = vadd.f32 %v692, %v703
    %v716 = vadd.f32 %v693, %v703
    %v717 = vadd.f32 %v694, %v703
    %v718 = vadd.f32 %v695, %v703
    %v719 = vadd.f32 %v696, %v703
    %v720 = vadd.f32 %v697, %v703
    %v721 = vmax.f32 %v705, 0.0
    %v722 = vmax.f32 %v706, 0.0
    %v723 = vmax.f32 %v707, 0.0
    %v724 = vmax.f32 %v708, 0.0
    %v725 = vmax.f32 %v709, 0.0
    %v726 = vmax.f32 %v710, 0.0
    %v727 = vmax.f32 %v711, 0.0
    %v728 = vmax.f32 %v712, 0.0
    %v729 = vmax.f32 %v713, 0.0
    %v730 = vmax.f32 %v714, 0.0
    %v731 = vmax.f32 %v715, 0.0
    %v732 = vmax.f32 %v716, 0.0
    %v733 = vmax.f32 %v717, 0.0
    %v734 = vmax.f32 %v718, 0.0
    %v735 = vmax.f32 %v719, 0.0
    %v736 = vmax.f32 %v720, 0.0
    %737 = vst.msk [vmem:[#allocation2] sm:$0xff] %vm62, %v721
    %738 = vst.msk [vmem:[#allocation2 + $0x8] sm:$0xff] %vm62, %v722
    %739 = vst.msk [vmem:[#allocation2 + $0x10] sm:$0xff] %vm62, %v723
    %740 = vst.msk [vmem:[#allocation2 + $0x18] sm:$0xff] %vm62, %v724
    %741 = vst.msk [vmem:[#allocation2 + $0x20] sm:$0xff] %vm62, %v725
    %742 = vst.msk [vmem:[#allocation2 + $0x28] sm:$0xff] %vm62, %v726
    %743 = vst.msk [vmem:[#allocation2 + $0x30] sm:$0xff] %vm62, %v727
    %744 = vst.msk [vmem:[#allocation2 + $0x38] sm:$0xff] %vm62, %v728
    %745 = vst.msk [vmem:[#allocation2 + $0x40] sm:$0xff] %vm62, %v729
    %746 = vst.msk [vmem:[#allocation2 + $0x48] sm:$0xff] %vm62, %v730
    %747 = vst.msk [vmem:[#allocation2 + $0x50] sm:$0xff] %vm62, %v731
    %748 = vst.msk [vmem:[#allocation2 + $0x58] sm:$0xff] %vm62, %v732
    %749 = vst.msk [vmem:[#allocation2 + $0x60] sm:$0xff] %vm62, %v733
    %750 = vst.msk [vmem:[#allocation2 + $0x68] sm:$0xff] %vm62, %v734
    %751 = vst.msk [vmem:[#allocation2 + $0x70] sm:$0xff] %vm62, %v735
    %752 = vst.msk [vmem:[#allocation2 + $0x78] sm:$0xff] %vm62, %v736
    // Predicated region
    $region22: #{tpu_custom_call.1} parent=1 // pred_check
      _
    $region23: #{tpu_custom_call.1} parent=1 // pred_check_branch
      %754 = sbr.rel (0) target = $region25
    $region24: #{tpu_custom_call.1} parent=1 // pred_region
      %s756 = ssub.s32 2048, 2048
      %757 = vsyncadd [#allocation3], %s756
      %s758 = sshll.u32 [#allocation2], 4
      %s759 = int_to_ptr.vmem [resolvable:$true] %s758
      %764 = dma.vmem_to_hbm [thread:$0]  %s759, 2048, %s5, [#allocation3], 128, 128, 8
    $region25: #{tpu_custom_call.1} parent=1 // pred_fallthru
      _
    // Predicated region
    $region26: #{tpu_custom_call.1} parent=1 // pred_check
      _
    $region27: #{tpu_custom_call.1} parent=1 // pred_check_branch
      %766 = sbr.rel (0) target = $region29
    $region28: #{tpu_custom_call.1} parent=1 // pred_region
      %767 = dma.done [#allocation3], 2048
    $region29: #{tpu_custom_call.1} parent=1 // pred_fallthru
      _
    %768 = vsyncpa [#allocation3], 1

</llo_original>
